<compile_context>
chip_gen: v7x
topology: tpu7x:2x2x1
jax: 0.10.0
libtpu: 0.0.40
codegen_flags: <defaults>
</compile_context>

<pallas_src>
import functools

import jax
import jax.numpy as jnp
from jax.experimental import pallas as pl
from jax.experimental.pallas import tpu as pltpu

HIDDEN = 256          # per-head hidden width (as in the PyTorch module)
TILE_B_MAX = 1024     # batch tile; larger tiles amortize per-grid-step overhead
OUT_W = 128           # lane-dense output width (q1 in col 0, q2 in col 1)


def _round_up(x, m):
    return ((x + m - 1) // m) * m


# ---------------------------------------------------------------------------
# Kernel: one batch tile through both Q heads.
# ---------------------------------------------------------------------------
def critic_kernel(x_ref, w14_ref, w25_ref, b25_ref, wout_ref, bout_ref, q_ref):
    cdt = w14_ref.dtype  # MXU operand dtype (f32 or bf16); x is already cdt.

    # Fused twin-head layer 1: x = [state|action|context|1|0...] (tile_b, 128),
    # w14 = (128, 512) with the bias folded in as the constant-1 row.
    hg = jnp.dot(x_ref[...], w14_ref[...], preferred_element_type=jnp.float32)
    hg = jnp.maximum(hg, 0.0)                     # (tile_b, 512), f32
    h = hg[:, :HIDDEN]                            # Q1 branch
    g = hg[:, HIDDEN:]                            # Q2 branch

    # Middle layers (kept separate: block-diag fusion would double the flops).
    # w25 stacks w2 on top of w5 -> static ref slices, zero-cost views.
    h2 = jnp.maximum(
        jnp.dot(h.astype(cdt), w25_ref[:HIDDEN, :],
                preferred_element_type=jnp.float32) + b25_ref[:, :HIDDEN], 0.0)
    g2 = jnp.maximum(
        jnp.dot(g.astype(cdt), w25_ref[HIDDEN:, :],
                preferred_element_type=jnp.float32) + b25_ref[:, HIDDEN:], 0.0)

    # Lane-dense fused output: (tile_b, 128); column 0 = q1, column 1 = q2,
    # remaining columns are zero-padded weights.
    q = jnp.dot(h2.astype(cdt), wout_ref[:HIDDEN, :],
                preferred_element_type=jnp.float32)
    q += jnp.dot(g2.astype(cdt), wout_ref[HIDDEN:, :],
                 preferred_element_type=jnp.float32)
    q_ref[...] = q + bout_ref[...]


# ---------------------------------------------------------------------------
# Parameter packing (done once, outside the hot path).
# ---------------------------------------------------------------------------
def pack_critic_params(params, state_dim, action_dim, context_dim,
                       dtype=jnp.float32):
    """Pack per-layer (w1..b6) params into the fused layout the kernel uses."""
    (w1, b1, w2, b2, w3, b3, w4, b4, w5, b5, w6, b6) = params
    d = state_dim + action_dim + context_dim
    d_pad = _round_up(d + 1, 128)  # +1 for the constant-1 (bias) column

    # Layer 1 of both heads, bias folded in as row `d` (hit by the 1-column).
    w14 = jnp.concatenate([w1, w4], axis=1)                    # (d, 512)
    b14 = jnp.concatenate([b1, b4], axis=1)                    # (1, 512)
    w14b = jnp.zeros((d_pad, 2 * HIDDEN), jnp.float32)
    w14b = w14b.at[:d, :].set(w14).at[d, :].set(b14[0])
    w14b = w14b.astype(dtype)

    # Middle layers stacked along rows: rows [:256] = w2, rows [256:] = w5.
    w25 = jnp.concatenate([w2, w5], axis=0).astype(dtype)      # (512, 256)
    b25 = jnp.concatenate([b2, b5], axis=1).astype(jnp.float32)  # (1, 512)

    # Output layer padded to 128 lanes: col 0 = w3 path, col 1 = w6 path.
    wout = jnp.zeros((2 * HIDDEN, OUT_W), jnp.float32)
    wout = wout.at[:HIDDEN, 0:1].set(w3).at[HIDDEN:, 1:2].set(w6)
    wout = wout.astype(dtype)
    bout = jnp.zeros((1, OUT_W), jnp.float32)
    bout = bout.at[0, 0].set(b3[0, 0]).at[0, 1].set(b6[0, 0])

    return (w14b, w25, b25, wout, bout)


# ---------------------------------------------------------------------------
# Wrapper.
# ---------------------------------------------------------------------------
@jax.jit
def critic_forward(state, action, context, packed_params):
    """Returns (q1, q2), each (B, 1) float32."""
    w14b, w25, b25, wout, bout = packed_params
    cdt = w14b.dtype
    d_pad = w14b.shape[0]

    B = state.shape[0]
    sa = jnp.concatenate([state, action, context], axis=-1).astype(jnp.float32)
    d = sa.shape[1]

    tile_b = min(TILE_B_MAX, _round_up(B, 8))
    b_pad = _round_up(B, tile_b)
    num_tiles = b_pad // tile_b

    # Lane-aligned input: [sa | 1 | zero-pad] -> (b_pad, d_pad), cast to the
    # MXU operand dtype so the kernel streams bf16 directly when packed bf16.
    ones = jnp.ones((B, 1), jnp.float32)
    x = jnp.concatenate([sa, ones], axis=1)                     # (B, d+1)
    x = jnp.pad(x, ((0, b_pad - B), (0, d_pad - (d + 1)))).astype(cdt)

    def resident_spec(arr):
        # Constant index_map -> weight/bias stays VMEM-resident across tiles.
        return pl.BlockSpec(arr.shape, lambda i: (0, 0))

    flops = 2 * b_pad * (d_pad * 2 * HIDDEN
                         + 2 * HIDDEN * HIDDEN
                         + 2 * HIDDEN * OUT_W)
    bytes_weights = sum(int(a.size) * a.dtype.itemsize for a in packed_params)
    bytes_io = int(x.size) * x.dtype.itemsize + b_pad * OUT_W * 4
    cost = pl.CostEstimate(flops=flops, transcendentals=0,
                           bytes_accessed=bytes_weights + bytes_io)

    q = pl.pallas_call(
        critic_kernel,
        out_shape=jax.ShapeDtypeStruct((b_pad, OUT_W), jnp.float32),
        grid=(num_tiles,),
        in_specs=[pl.BlockSpec((tile_b, d_pad), lambda i: (i, 0))]
                 + [resident_spec(a) for a in packed_params],
        out_specs=pl.BlockSpec((tile_b, OUT_W), lambda i: (i, 0)),
        compiler_params=pltpu.CompilerParams(
            dimension_semantics=("parallel",)),
        cost_estimate=cost,
    )(x, *packed_params)

    # Padded rows / padded lanes are garbage; slice them off here.
    return q[:B, 0:1], q[:B, 1:2]


# ---------------------------------------------------------------------------
# Init + pure-JAX reference (mirrors the PyTorch module).
# ---------------------------------------------------------------------------
def init_linear(key, fan_in, fan_out):
    """PyTorch-style default init: U(-1/sqrt(fan_in), 1/sqrt(fan_in))."""
    kw, kb = jax.random.split(key)
    bound = 1.0 / jnp.sqrt(fan_in)
    w = jax.random.uniform(kw, (fan_in, fan_out), jnp.float32, -bound, bound)
    b = jax.random.uniform(kb, (1, fan_out), jnp.float32, -bound, bound)
    return w, b


def make_critic_params(key, state_dim, action_dim, context_dim, hidden=HIDDEN):
    d = state_dim + action_dim + context_dim
    keys = jax.random.split(key, 6)
    w1, b1 = init_linear(keys[0], d, hidden)
    w2, b2 = init_linear(keys[1], hidden, hidden)
    w3, b3 = init_linear(keys[2], hidden, 1)
    w4, b4 = init_linear(keys[3], d, hidden)
    w5, b5 = init_linear(keys[4], hidden, hidden)
    w6, b6 = init_linear(keys[5], hidden, 1)
    return (w1, b1, w2, b2, w3, b3, w4, b4, w5, b5, w6, b6)


def critic_forward_ref(state, action, context, params):
    (w1, b1, w2, b2, w3, b3, w4, b4, w5, b5, w6, b6) = params
    sa = jnp.concatenate([state, action, context], axis=-1).astype(jnp.float32)
    q1 = jnp.maximum(sa @ w1 + b1, 0.0)
    q1 = jnp.maximum(q1 @ w2 + b2, 0.0)
    q1 = q1 @ w3 + b3
    q2 = jnp.maximum(sa @ w4 + b4, 0.0)
    q2 = jnp.maximum(q2 @ w5 + b5, 0.0)
    q2 = q2 @ w6 + b6
    return q1, q2


if __name__ == "__main__":
    state_dim, action_dim, context_dim = 17, 6, 9  # concat dim = 32 (+1 bias)

    key = jax.random.PRNGKey(0)
    k_params, k_s, k_a, k_c = jax.random.split(key, 4)
    params = make_critic_params(k_params, state_dim, action_dim, context_dim)

    packed_f32 = pack_critic_params(params, state_dim, action_dim, context_dim,
                                    dtype=jnp.float32)
    packed_bf16 = pack_critic_params(params, state_dim, action_dim, context_dim,
                                     dtype=jnp.bfloat16)

    # --- small batch (single tile), f32 weights, tight tolerance ------------
    B = 8
    state = jax.random.normal(k_s, (B, state_dim), jnp.float32)
    action = jax.random.normal(k_a, (B, action_dim), jnp.float32)
    context = jax.random.normal(k_c, (B, context_dim), jnp.float32)

    q1, q2 = critic_forward(state, action, context, packed_f32)
    jax.block_until_ready((q1, q2))
    q1_ref, q2_ref = critic_forward_ref(state, action, context, params)
    assert q1.shape == (B, 1) and q2.shape == (B, 1)
    assert jnp.allclose(q1, q1_ref, atol=1e-4, rtol=1e-4)
    assert jnp.allclose(q2, q2_ref, atol=1e-4, rtol=1e-4)

    # --- ragged batch (padding + multi-tile grid), f32 ----------------------
    B2 = 1300  # tile_b = 1024 -> 2 grid steps with 748 padded rows
    k_s2, k_a2, k_c2 = jax.random.split(jax.random.PRNGKey(1), 3)
    state2 = jax.random.normal(k_s2, (B2, state_dim), jnp.float32)
    action2 = jax.random.normal(k_a2, (B2, action_dim), jnp.float32)
    context2 = jax.random.normal(k_c2, (B2, context_dim), jnp.float32)

    p1, p2 = critic_forward(state2, action2, context2, packed_f32)
    jax.block_until_ready((p1, p2))
    r1, r2 = critic_forward_ref(state2, action2, context2, params)
    assert p1.shape == (B2, 1) and p2.shape == (B2, 1)
    assert jnp.allclose(p1, r1, atol=1e-4, rtol=1e-4)
    assert jnp.allclose(p2, r2, atol=1e-4, rtol=1e-4)

    # --- bf16 weights (native MXU path, mandatory on v5e), loose tolerance --
    b1_, b2_ = critic_forward(state2, action2, context2, packed_bf16)
    jax.block_until_ready((b1_, b2_))
    assert jnp.allclose(b1_, r1, atol=5e-2, rtol=5e-2)
    assert jnp.allclose(b2_, r2, atol=5e-2, rtol=5e-2)

    print("KERNEL_OK")
</pallas_src>

<mosaic_0001>
module attributes {stable_mosaic.version = 11 : i64} {
  func.func @critic_kernel(%arg0: i32, %arg1: memref<8x128xf32, #tpu.memory_space<vmem>>, %arg2: memref<128x512xf32, #tpu.memory_space<vmem>>, %arg3: memref<512x256xf32, #tpu.memory_space<vmem>>, %arg4: memref<1x512xf32, #tpu.memory_space<vmem>>, %arg5: memref<512x128xf32, #tpu.memory_space<vmem>>, %arg6: memref<1x128xf32, #tpu.memory_space<vmem>>, %arg7: memref<8x128xf32, #tpu.memory_space<vmem>>) attributes {dimension_semantics = [#tpu.dimension_semantics<parallel>], iteration_bounds = array<i64: 1>, scalar_prefetch = 0 : i64, scratch_operands = 0 : i64, tpu.core_type = #tpu.core_type<tc>, window_params = [{transform_indices = @transform_0, window_bounds = array<i64: 8, 128>}, {pipeline_mode = #tpu.pipeline_mode<synchronous>, transform_indices = @transform_1, window_bounds = array<i64: 128, 512>}, {pipeline_mode = #tpu.pipeline_mode<synchronous>, transform_indices = @transform_2, window_bounds = array<i64: 512, 256>}, {pipeline_mode = #tpu.pipeline_mode<synchronous>, transform_indices = @transform_3, window_bounds = array<i64: 1, 512>}, {pipeline_mode = #tpu.pipeline_mode<synchronous>, transform_indices = @transform_4, window_bounds = array<i64: 512, 128>}, {pipeline_mode = #tpu.pipeline_mode<synchronous>, transform_indices = @transform_5, window_bounds = array<i64: 1, 128>}, {transform_indices = @transform_6, window_bounds = array<i64: 8, 128>}]} {
    %c0 = arith.constant 0 : index
    %c0_0 = arith.constant 0 : index
    %0 = vector.load %arg1[%c0, %c0_0] : memref<8x128xf32, #tpu.memory_space<vmem>>, vector<8x128xf32>
    %c0_1 = arith.constant 0 : index
    %c0_2 = arith.constant 0 : index
    %1 = vector.load %arg2[%c0_1, %c0_2] : memref<128x512xf32, #tpu.memory_space<vmem>>, vector<128x512xf32>
    %cst = arith.constant dense<0.000000e+00> : vector<8x512xf32>
    %2 = tpu.matmul %0, %1, %cst {dimension_numbers = #tpu.dot_dimension_numbers<[1], [0], [0], [1], [0, 0, 1, 1], [], []>} : vector<8x128xf32>, vector<128x512xf32>, vector<8x512xf32> -> vector<8x512xf32>
    %cst_3 = arith.constant 0.000000e+00 : f32
    %3 = vector.broadcast %cst_3 : f32 to vector<8x512xf32>
    %4 = arith.maximumf %2, %3 : vector<8x512xf32>
    %5 = vector.extract_strided_slice %4 {offsets = [0, 0], sizes = [8, 256], strides = [1, 1]} : vector<8x512xf32> to vector<8x256xf32>
    %6 = vector.extract_strided_slice %4 {offsets = [0, 256], sizes = [8, 256], strides = [1, 1]} : vector<8x512xf32> to vector<8x256xf32>
    %c0_4 = arith.constant 0 : index
    %c0_5 = arith.constant 0 : index
    %7 = vector.load %arg3[%c0_4, %c0_5] : memref<512x256xf32, #tpu.memory_space<vmem>>, vector<256x256xf32>
    %cst_6 = arith.constant dense<0.000000e+00> : vector<8x256xf32>
    %8 = tpu.matmul %5, %7, %cst_6 {dimension_numbers = #tpu.dot_dimension_numbers<[1], [0], [0], [1], [0, 0, 1, 1], [], []>} : vector<8x256xf32>, vector<256x256xf32>, vector<8x256xf32> -> vector<8x256xf32>
    %c0_7 = arith.constant 0 : index
    %c0_8 = arith.constant 0 : index
    %9 = vector.load %arg4[%c0_7, %c0_8] : memref<1x512xf32, #tpu.memory_space<vmem>>, vector<1x256xf32>
    %10 = vector.broadcast %9 : vector<1x256xf32> to vector<8x256xf32>
    %11 = arith.addf %8, %10 : vector<8x256xf32>
    %cst_9 = arith.constant 0.000000e+00 : f32
    %12 = vector.broadcast %cst_9 : f32 to vector<8x256xf32>
    %13 = arith.maximumf %11, %12 : vector<8x256xf32>
    %c256 = arith.constant 256 : index
    %c0_10 = arith.constant 0 : index
    %14 = vector.load %arg3[%c256, %c0_10] : memref<512x256xf32, #tpu.memory_space<vmem>>, vector<256x256xf32>
    %cst_11 = arith.constant dense<0.000000e+00> : vector<8x256xf32>
    %15 = tpu.matmul %6, %14, %cst_11 {dimension_numbers = #tpu.dot_dimension_numbers<[1], [0], [0], [1], [0, 0, 1, 1], [], []>} : vector<8x256xf32>, vector<256x256xf32>, vector<8x256xf32> -> vector<8x256xf32>
    %c0_12 = arith.constant 0 : index
    %c256_13 = arith.constant 256 : index
    %16 = vector.load %arg4[%c0_12, %c256_13] : memref<1x512xf32, #tpu.memory_space<vmem>>, vector<1x256xf32>
    %17 = vector.broadcast %16 : vector<1x256xf32> to vector<8x256xf32>
    %18 = arith.addf %15, %17 : vector<8x256xf32>
    %cst_14 = arith.constant 0.000000e+00 : f32
    %19 = vector.broadcast %cst_14 : f32 to vector<8x256xf32>
    %20 = arith.maximumf %18, %19 : vector<8x256xf32>
    %c0_15 = arith.constant 0 : index
    %c0_16 = arith.constant 0 : index
    %21 = vector.load %arg5[%c0_15, %c0_16] : memref<512x128xf32, #tpu.memory_space<vmem>>, vector<256x128xf32>
    %cst_17 = arith.constant dense<0.000000e+00> : vector<8x128xf32>
    %22 = tpu.matmul %13, %21, %cst_17 {dimension_numbers = #tpu.dot_dimension_numbers<[1], [0], [0], [1], [0, 0, 1, 1], [], []>} : vector<8x256xf32>, vector<256x128xf32>, vector<8x128xf32> -> vector<8x128xf32>
    %c256_18 = arith.constant 256 : index
    %c0_19 = arith.constant 0 : index
    %23 = vector.load %arg5[%c256_18, %c0_19] : memref<512x128xf32, #tpu.memory_space<vmem>>, vector<256x128xf32>
    %cst_20 = arith.constant dense<0.000000e+00> : vector<8x128xf32>
    %24 = tpu.matmul %20, %23, %cst_20 {dimension_numbers = #tpu.dot_dimension_numbers<[1], [0], [0], [1], [0, 0, 1, 1], [], []>} : vector<8x256xf32>, vector<256x128xf32>, vector<8x128xf32> -> vector<8x128xf32>
    %25 = arith.addf %22, %24 : vector<8x128xf32>
    %c0_21 = arith.constant 0 : index
    %c0_22 = arith.constant 0 : index
    %26 = vector.load %arg6[%c0_21, %c0_22] : memref<1x128xf32, #tpu.memory_space<vmem>>, vector<1x128xf32>
    %27 = vector.broadcast %26 : vector<1x128xf32> to vector<8x128xf32>
    %28 = arith.addf %25, %27 : vector<8x128xf32>
    %c0_23 = arith.constant 0 : index
    %c0_24 = arith.constant 0 : index
    %29 = vector.load %arg7[%c0_23, %c0_24] : memref<8x128xf32, #tpu.memory_space<vmem>>, vector<8x128xf32>
    tpu.vector_store %arg7[%c0_23, %c0_24], %28 {strides = array<i32>} : memref<8x128xf32, #tpu.memory_space<vmem>>, vector<8x128xf32>,
    return
  }
  func.func @transform_0(%arg0: i32) -> (i32, i32) {
    %c0_i32 = arith.constant 0 : i32
    %c0_i32_0 = arith.constant 0 : i32
    return %arg0, %c0_i32 : i32, i32
  }
  func.func @transform_1(%arg0: i32) -> (i32, i32) {
    %c0_i32 = arith.constant 0 : i32
    %c0_i32_0 = arith.constant 0 : i32
    %c0_i32_1 = arith.constant 0 : i32
    return %c0_i32, %c0_i32_0 : i32, i32
  }
  func.func @transform_2(%arg0: i32) -> (i32, i32) {
    %c0_i32 = arith.constant 0 : i32
    %c0_i32_0 = arith.constant 0 : i32
    %c0_i32_1 = arith.constant 0 : i32
    return %c0_i32, %c0_i32_0 : i32, i32
  }
  func.func @transform_3(%arg0: i32) -> (i32, i32) {
    %c0_i32 = arith.constant 0 : i32
    %c0_i32_0 = arith.constant 0 : i32
    %c0_i32_1 = arith.constant 0 : i32
    return %c0_i32, %c0_i32_0 : i32, i32
  }
  func.func @transform_4(%arg0: i32) -> (i32, i32) {
    %c0_i32 = arith.constant 0 : i32
    %c0_i32_0 = arith.constant 0 : i32
    %c0_i32_1 = arith.constant 0 : i32
    return %c0_i32, %c0_i32_0 : i32, i32
  }
  func.func @transform_5(%arg0: i32) -> (i32, i32) {
    %c0_i32 = arith.constant 0 : i32
    %c0_i32_0 = arith.constant 0 : i32
    %c0_i32_1 = arith.constant 0 : i32
    return %c0_i32, %c0_i32_0 : i32, i32
  }
  func.func @transform_6(%arg0: i32) -> (i32, i32) {
    %c0_i32 = arith.constant 0 : i32
    %c0_i32_0 = arith.constant 0 : i32
    return %arg0, %c0_i32 : i32, i32
  }
}

</mosaic_0001>

<llo_original>
// kernel: critic_forward.1
$region0: #{critic_forward.1}
  #allocation0 [shape = 'u32[]', space=smem, size = 0x4, offset = 0x4, fixed_abs, tag = 'smem constant byte address 0x4 - core index']
  #allocation1 [shape = 'u32[144,128]{1,0:T(1,128)}', space=vmem, size = 0x12000, scoped, tag = 'internal scratch']
  %s0 = inlined_call_operand.vmem [shape: f32[8,128], index: 0, kind: input, shape index: {}]
  %s1 = inlined_call_operand.hbm [shape: f32[128,512], index: 1, kind: input, shape index: {}]
  %s2 = inlined_call_operand.hbm [shape: f32[512,256], index: 2, kind: input, shape index: {}]
  %s3 = inlined_call_operand.vmem [shape: f32[1,512], index: 3, kind: input, shape index: {}]
  %s4 = inlined_call_operand.hbm [shape: f32[512,128], index: 4, kind: input, shape index: {}]
  %s5 = inlined_call_operand.vmem [shape: f32[1,128], index: 5, kind: input, shape index: {}]
  %s6 = inlined_call_operand.vmem [shape: f32[8,128], index: 6, kind: output, shape index: {}]
  %s7 = sld [smem:[#allocation0]]
  $region46: #{critic_forward.1} parent=0
    _
  %s9 = ssub.s32 1, %s7
  %s10 = scalar_select 0, %s9, %s7
  $region1: #{critic_forward.1} parent=0
    #allocation2 [shape = 'u8[262144]{0}', space=vmem, size = 0x40000, scoped, tag = 'input window, operand 1, single buffered']
    #allocation3 [shape = 's32[1]{0}', space=sflag, size = 0x4, scoped, tag = 'scoped memory for critic_forward.1']
    #allocation4 [shape = 'u8[524288]{0}', space=vmem, size = 0x80000, scoped, tag = 'input window, operand 2, single buffered']
    #allocation5 [shape = 's32[1]{0}', space=sflag, size = 0x4, scoped, tag = 'scoped memory for critic_forward.1']
    #allocation6 [shape = 'u8[262144]{0}', space=vmem, size = 0x40000, scoped, tag = 'input window, operand 4, single buffered']
    %11 = vsyncpa [#allocation3], 0
    %12 = vsyncpa [#allocation5], 0
    // Predicated region
    $region2: #{critic_forward.1} parent=1 // pred_check
      _
    $region3: #{critic_forward.1} parent=1 // pred_check_branch
      %14 = sbr.rel (0) target = $region5
    $region4: #{critic_forward.1} parent=1 // pred_region
      _
    $region5: #{critic_forward.1} parent=1 // pred_fallthru
      _
    // Predicated region
    $region6: #{critic_forward.1} parent=1 // pred_check
      _
    $region7: #{critic_forward.1} parent=1 // pred_check_branch
      %16 = sbr.rel (0) target = $region9
    $region8: #{critic_forward.1} parent=1 // pred_region
      %s18 = ssub.s32 8192, 8192
      %19 = vsyncadd [#allocation3], %s18
      %s20 = sshll.u32 [#allocation2], 4
      %s21 = int_to_ptr.vmem [resolvable:$true] %s20
      %26 = dma.hbm_to_vmem [thread:$0]  %s1, 8192, %s21, [#allocation3], 512, 512, 32
    $region9: #{critic_forward.1} parent=1 // pred_fallthru
      _
    // Predicated region
    $region10: #{critic_forward.1} parent=1 // pred_check
      _
    $region11: #{critic_forward.1} parent=1 // pred_check_branch
      %28 = sbr.rel (0) target = $region13
    $region12: #{critic_forward.1} parent=1 // pred_region
      %s30 = ssub.s32 16384, 16384
      %31 = vsyncadd [#allocation5], %s30
      %s32 = sshll.u32 [#allocation4], 4
      %s33 = int_to_ptr.vmem [resolvable:$true] %s32
      %38 = dma.hbm_to_vmem [thread:$0]  %s2, 16384, %s33, [#allocation5], 256, 256, 16
    $region13: #{critic_forward.1} parent=1 // pred_fallthru
      _
    // Predicated region
    $region14: #{critic_forward.1} parent=1 // pred_check
      _
    $region15: #{critic_forward.1} parent=1 // pred_check_branch
      %40 = sbr.rel (0) target = $region17
    $region16: #{critic_forward.1} parent=1 // pred_region
      _
    $region17: #{critic_forward.1} parent=1 // pred_fallthru
      _
    // Predicated region
    $region18: #{critic_forward.1} parent=1 // pred_check
      _
    $region19: #{critic_forward.1} parent=1 // pred_check_branch
      %42 = sbr.rel (0) target = $region21
    $region20: #{critic_forward.1} parent=1 // pred_region
      %s44 = ssub.s32 8192, 8192
      %45 = vsyncadd [#allocation5], %s44
      %s46 = sshll.u32 [#allocation6], 4
      %s47 = int_to_ptr.vmem [resolvable:$true] %s46
      %52 = dma.hbm_to_vmem [thread:$0]  %s4, 8192, %s47, [#allocation5], 128, 128, 8
    $region21: #{critic_forward.1} parent=1 // pred_fallthru
      _
    // Predicated region
    $region22: #{critic_forward.1} parent=1 // pred_check
      _
    $region23: #{critic_forward.1} parent=1 // pred_check_branch
      %54 = sbr.rel (0) target = $region25
    $region24: #{critic_forward.1} parent=1 // pred_region
      _
    $region25: #{critic_forward.1} parent=1 // pred_fallthru
      _
    // Predicated region
    $region26: #{critic_forward.1} parent=1 // pred_check
      _
    $region27: #{critic_forward.1} parent=1 // pred_check_branch
      %56 = sbr.rel (0) target = $region29
    $region28: #{critic_forward.1} parent=1 // pred_region
      %57 = dma.done [#allocation3], 8192
    $region29: #{critic_forward.1} parent=1 // pred_fallthru
      _
    // Predicated region
    $region30: #{critic_forward.1} parent=1 // pred_check
      _
    $region31: #{critic_forward.1} parent=1 // pred_check_branch
      %59 = sbr.rel (0) target = $region33
    $region32: #{critic_forward.1} parent=1 // pred_region
      %60 = dma.done [#allocation5], 16384
    $region33: #{critic_forward.1} parent=1 // pred_fallthru
      _
    // Predicated region
    $region34: #{critic_forward.1} parent=1 // pred_check
      _
    $region35: #{critic_forward.1} parent=1 // pred_check_branch
      %62 = sbr.rel (0) target = $region37
    $region36: #{critic_forward.1} parent=1 // pred_region
      %63 = dma.done [#allocation5], 8192
    $region37: #{critic_forward.1} parent=1 // pred_fallthru
      _
    %v64 = vld [vmem:[%s0] sm:$0xff]
    %v65 = vld [vmem:[#allocation2] sm:$0xff]
    %v66 = vld [vmem:[#allocation2 + $0x8] sm:$0xff]
    %v67 = vld [vmem:[#allocation2 + $0x10] sm:$0xff]
    %v68 = vld [vmem:[#allocation2 + $0x18] sm:$0xff]
    %v69 = vld [vmem:[#allocation2 + $0x20] sm:$0xff]
    %v70 = vld [vmem:[#allocation2 + $0x28] sm:$0xff]
    %v71 = vld [vmem:[#allocation2 + $0x30] sm:$0xff]
    %v72 = vld [vmem:[#allocation2 + $0x38] sm:$0xff]
    %v73 = vld [vmem:[#allocation2 + $0x40] sm:$0xff]
    %v74 = vld [vmem:[#allocation2 + $0x48] sm:$0xff]
    %v75 = vld [vmem:[#allocation2 + $0x50] sm:$0xff]
    %v76 = vld [vmem:[#allocation2 + $0x58] sm:$0xff]
    %v77 = vld [vmem:[#allocation2 + $0x60] sm:$0xff]
    %v78 = vld [vmem:[#allocation2 + $0x68] sm:$0xff]
    %v79 = vld [vmem:[#allocation2 + $0x70] sm:$0xff]
    %v80 = vld [vmem:[#allocation2 + $0x78] sm:$0xff]
    %v81 = vld [vmem:[#allocation2 + $0x80] sm:$0xff]
    %v82 = vld [vmem:[#allocation2 + $0x88] sm:$0xff]
    %v83 = vld [vmem:[#allocation2 + $0x90] sm:$0xff]
    %v84 = vld [vmem:[#allocation2 + $0x98] sm:$0xff]
    %v85 = vld [vmem:[#allocation2 + $0xa0] sm:$0xff]
    %v86 = vld [vmem:[#allocation2 + $0xa8] sm:$0xff]
    %v87 = vld [vmem:[#allocation2 + $0xb0] sm:$0xff]
    %v88 = vld [vmem:[#allocation2 + $0xb8] sm:$0xff]
    %v89 = vld [vmem:[#allocation2 + $0xc0] sm:$0xff]
    %v90 = vld [vmem:[#allocation2 + $0xc8] sm:$0xff]
    %v91 = vld [vmem:[#allocation2 + $0xd0] sm:$0xff]
    %v92 = vld [vmem:[#allocation2 + $0xd8] sm:$0xff]
    %v93 = vld [vmem:[#allocation2 + $0xe0] sm:$0xff]
    %v94 = vld [vmem:[#allocation2 + $0xe8] sm:$0xff]
    %v95 = vld [vmem:[#allocation2 + $0xf0] sm:$0xff]
    %v96 = vld [vmem:[#allocation2 + $0xf8] sm:$0xff]
    %v97 = vld [vmem:[#allocation2 + $0x100] sm:$0xff]
    %v98 = vld [vmem:[#allocation2 + $0x108] sm:$0xff]
    %v99 = vld [vmem:[#allocation2 + $0x110] sm:$0xff]
    %v100 = vld [vmem:[#allocation2 + $0x118] sm:$0xff]
    %v101 = vld [vmem:[#allocation2 + $0x120] sm:$0xff]
    %v102 = vld [vmem:[#allocation2 + $0x128] sm:$0xff]
    %v103 = vld [vmem:[#allocation2 + $0x130] sm:$0xff]
    %v104 = vld [vmem:[#allocation2 + $0x138] sm:$0xff]
    %v105 = vld [vmem:[#allocation2 + $0x140] sm:$0xff]
    %v106 = vld [vmem:[#allocation2 + $0x148] sm:$0xff]
    %v107 = vld [vmem:[#allocation2 + $0x150] sm:$0xff]
    %v108 = vld [vmem:[#allocation2 + $0x158] sm:$0xff]
    %v109 = vld [vmem:[#allocation2 + $0x160] sm:$0xff]
    %v110 = vld [vmem:[#allocation2 + $0x168] sm:$0xff]
    %v111 = vld [vmem:[#allocation2 + $0x170] sm:$0xff]
    %v112 = vld [vmem:[#allocation2 + $0x178] sm:$0xff]
    %v113 = vld [vmem:[#allocation2 + $0x180] sm:$0xff]
    %v114 = vld [vmem:[#allocation2 + $0x188] sm:$0xff]
    %v115 = vld [vmem:[#allocation2 + $0x190] sm:$0xff]
    %v116 = vld [vmem:[#allocation2 + $0x198] sm:$0xff]
    %v117 = vld [vmem:[#allocation2 + $0x1a0] sm:$0xff]
    %v118 = vld [vmem:[#allocation2 + $0x1a8] sm:$0xff]
    %v119 = vld [vmem:[#allocation2 + $0x1b0] sm:$0xff]
    %v120 = vld [vmem:[#allocation2 + $0x1b8] sm:$0xff]
    %v121 = vld [vmem:[#allocation2 + $0x1c0] sm:$0xff]
    %v122 = vld [vmem:[#allocation2 + $0x1c8] sm:$0xff]
    %v123 = vld [vmem:[#allocation2 + $0x1d0] sm:$0xff]
    %v124 = vld [vmem:[#allocation2 + $0x1d8] sm:$0xff]
    %v125 = vld [vmem:[#allocation2 + $0x1e0] sm:$0xff]
    %v126 = vld [vmem:[#allocation2 + $0x1e8] sm:$0xff]
    %v127 = vld [vmem:[#allocation2 + $0x1f0] sm:$0xff]
    %v128 = vld [vmem:[#allocation2 + $0x1f8] sm:$0xff]
    %129 = vmatprep.subr.mxu0 %v66
    %130 = vmatpush1.msra.mxu0 %v65
    %131 = vmatprep.subr.mxu0 %v70
    %132 = vmatpush1.msra.mxu0 %v69
    %133 = vmatprep.subr.mxu0 %v74
    %134 = vmatpush1.msra.mxu0 %v73
    %135 = vmatprep.subr.mxu0 %v78
    %136 = vmatpush1.msra.mxu0 %v77
    %137 = vmatprep.subr.mxu0 %v82
    %138 = vmatpush1.msra.mxu0 %v81
    %139 = vmatprep.subr.mxu0 %v86
    %140 = vmatpush1.msra.mxu0 %v85
    %141 = vmatprep.subr.mxu0 %v90
    %142 = vmatpush1.msra.mxu0 %v89
    %143 = vmatprep.subr.mxu0 %v94
    %144 = vmatpush1.msra.mxu0 %v93
    %145 = vmatprep.subr.mxu0 %v98
    %146 = vmatpush1.msra.mxu0 %v97
    %147 = vmatprep.subr.mxu0 %v102
    %148 = vmatpush1.msra.mxu0 %v101
    %149 = vmatprep.subr.mxu0 %v106
    %150 = vmatpush1.msra.mxu0 %v105
    %151 = vmatprep.subr.mxu0 %v110
    %152 = vmatpush1.msra.mxu0 %v109
    %153 = vmatprep.subr.mxu0 %v114
    %154 = vmatpush1.msra.mxu0 %v113
    %155 = vmatprep.subr.mxu0 %v118
    %156 = vmatpush1.msra.mxu0 %v117
    %157 = vmatprep.subr.mxu0 %v122
    %158 = vmatpush1.msra.mxu0 %v121
    %159 = vmatprep.subr.mxu0 %v126
    %160 = vmatpush1.msra.mxu0 %v125
    %161 = vmatprep.subr.mxu0 0.0
    %162 = vmatpush1.msra.mxu0 0.0
    %163 = vmatprep.subr.mxu0 0.0
    %164 = vmatpush1.msra.mxu0 0.0
    %165 = vmatprep.subr.mxu0 0.0
    %166 = vmatpush1.msra.mxu0 0.0
    %167 = vmatprep.subr.mxu0 0.0
    %168 = vmatpush1.msra.mxu0 0.0
    %169 = vmatprep.subr.mxu0 0.0
    %170 = vmatpush1.msra.mxu0 0.0
    %171 = vmatprep.subr.mxu0 0.0
    %172 = vmatpush1.msra.mxu0 0.0
    %173 = vmatprep.subr.mxu0 0.0
    %174 = vmatpush1.msra.mxu0 0.0
    %175 = vmatprep.subr.mxu0 0.0
    %176 = vmatpush1.msra.mxu0 0.0
    %177 = vmatprep.subr.mxu0 0.0
    %178 = vmatpush1.msra.mxu0 0.0
    %179 = vmatprep.subr.mxu0 0.0
    %180 = vmatpush1.msra.mxu0 0.0
    %181 = vmatprep.subr.mxu0 0.0
    %182 = vmatpush1.msra.mxu0 0.0
    %183 = vmatprep.subr.mxu0 0.0
    %184 = vmatpush1.msra.mxu0 0.0
    %185 = vmatprep.subr.mxu0 0.0
    %186 = vmatpush1.msra.mxu0 0.0
    %187 = vmatprep.subr.mxu0 0.0
    %188 = vmatpush1.msra.mxu0 0.0
    %189 = vmatprep.subr.mxu0 0.0
    %190 = vmatpush1.msra.mxu0 0.0
    %191 = vmatprep.subr.mxu0 0.0
    %192 = vmatpush1.msra.mxu0 0.0
    %193 = vmatprep.mubr.f32.mxu0 0.0
    %194 = vmatmul.mubr.f32.gmra.mrb[0].mxu0 %v64
    %v195 = vpop.f32.mrb[0].mxu0
    %v196 = vadd.f32 0.0, %v195
    %v197 = vpop.f32.mrb[0].mxu0
    %v198 = vadd.f32 0.0, %v197
    %199 = vdwg.mxu0
    %200 = vmatprep.subr.mxu0 %v68
    %201 = vmatpush1.msra.mxu0 %v67
    %202 = vmatprep.subr.mxu0 %v72
    %203 = vmatpush1.msra.mxu0 %v71
    %204 = vmatprep.subr.mxu0 %v76
    %205 = vmatpush1.msra.mxu0 %v75
    %206 = vmatprep.subr.mxu0 %v80
    %207 = vmatpush1.msra.mxu0 %v79
    %208 = vmatprep.subr.mxu0 %v84
    %209 = vmatpush1.msra.mxu0 %v83
    %210 = vmatprep.subr.mxu0 %v88
    %211 = vmatpush1.msra.mxu0 %v87
    %212 = vmatprep.subr.mxu0 %v92
    %213 = vmatpush1.msra.mxu0 %v91
    %214 = vmatprep.subr.mxu0 %v96
    %215 = vmatpush1.msra.mxu0 %v95
    %216 = vmatprep.subr.mxu0 %v100
    %217 = vmatpush1.msra.mxu0 %v99
    %218 = vmatprep.subr.mxu0 %v104
    %219 = vmatpush1.msra.mxu0 %v103
    %220 = vmatprep.subr.mxu0 %v108
    %221 = vmatpush1.msra.mxu0 %v107
    %222 = vmatprep.subr.mxu0 %v112
    %223 = vmatpush1.msra.mxu0 %v111
    %224 = vmatprep.subr.mxu0 %v116
    %225 = vmatpush1.msra.mxu0 %v115
    %226 = vmatprep.subr.mxu0 %v120
    %227 = vmatpush1.msra.mxu0 %v119
    %228 = vmatprep.subr.mxu0 %v124
    %229 = vmatpush1.msra.mxu0 %v123
    %230 = vmatprep.subr.mxu0 %v128
    %231 = vmatpush1.msra.mxu0 %v127
    %232 = vmatprep.subr.mxu0 0.0
    %233 = vmatpush1.msra.mxu0 0.0
    %234 = vmatprep.subr.mxu0 0.0
    %235 = vmatpush1.msra.mxu0 0.0
    %236 = vmatprep.subr.mxu0 0.0
    %237 = vmatpush1.msra.mxu0 0.0
    %238 = vmatprep.subr.mxu0 0.0
    %239 = vmatpush1.msra.mxu0 0.0
    %240 = vmatprep.subr.mxu0 0.0
    %241 = vmatpush1.msra.mxu0 0.0
    %242 = vmatprep.subr.mxu0 0.0
    %243 = vmatpush1.msra.mxu0 0.0
    %244 = vmatprep.subr.mxu0 0.0
    %245 = vmatpush1.msra.mxu0 0.0
    %246 = vmatprep.subr.mxu0 0.0
    %247 = vmatpush1.msra.mxu0 0.0
    %248 = vmatprep.subr.mxu0 0.0
    %249 = vmatpush1.msra.mxu0 0.0
    %250 = vmatprep.subr.mxu0 0.0
    %251 = vmatpush1.msra.mxu0 0.0
    %252 = vmatprep.subr.mxu0 0.0
    %253 = vmatpush1.msra.mxu0 0.0
    %254 = vmatprep.subr.mxu0 0.0
    %255 = vmatpush1.msra.mxu0 0.0
    %256 = vmatprep.subr.mxu0 0.0
    %257 = vmatpush1.msra.mxu0 0.0
    %258 = vmatprep.subr.mxu0 0.0
    %259 = vmatpush1.msra.mxu0 0.0
    %260 = vmatprep.subr.mxu0 0.0
    %261 = vmatpush1.msra.mxu0 0.0
    %262 = vmatprep.subr.mxu0 0.0
    %263 = vmatpush1.msra.mxu0 0.0
    %264 = vmatprep.mubr.f32.mxu0 0.0
    %265 = vmatmul.mubr.f32.gmra.mrb[0].mxu0 %v64
    %v266 = vpop.f32.mrb[0].mxu0
    %v267 = vadd.f32 0.0, %v266
    %v268 = vpop.f32.mrb[0].mxu0
    %v269 = vadd.f32 0.0, %v268
    %270 = vdwg.mxu0
    %v271 = vmax.f32 %v196, 0.0
    %v272 = vmax.f32 %v198, 0.0
    %v273 = vmax.f32 %v267, 0.0
    %v274 = vmax.f32 %v269, 0.0
    %v275 = vld [vmem:[#allocation4] sm:$0xff]
    %v276 = vld [vmem:[#allocation4 + $0x8] sm:$0xff]
    %v277 = vld [vmem:[#allocation4 + $0x10] sm:$0xff]
    %v278 = vld [vmem:[#allocation4 + $0x18] sm:$0xff]
    %v279 = vld [vmem:[#allocation4 + $0x20] sm:$0xff]
    %v280 = vld [vmem:[#allocation4 + $0x28] sm:$0xff]
    %v281 = vld [vmem:[#allocation4 + $0x30] sm:$0xff]
    %v282 = vld [vmem:[#allocation4 + $0x38] sm:$0xff]
    %v283 = vld [vmem:[#allocation4 + $0x40] sm:$0xff]
    %v284 = vld [vmem:[#allocation4 + $0x48] sm:$0xff]
    %v285 = vld [vmem:[#allocation4 + $0x50] sm:$0xff]
    %v286 = vld [vmem:[#allocation4 + $0x58] sm:$0xff]
    %v287 = vld [vmem:[#allocation4 + $0x60] sm:$0xff]
    %v288 = vld [vmem:[#allocation4 + $0x68] sm:$0xff]
    %v289 = vld [vmem:[#allocation4 + $0x70] sm:$0xff]
    %v290 = vld [vmem:[#allocation4 + $0x78] sm:$0xff]
    %v291 = vld [vmem:[#allocation4 + $0x80] sm:$0xff]
    %v292 = vld [vmem:[#allocation4 + $0x88] sm:$0xff]
    %v293 = vld [vmem:[#allocation4 + $0x90] sm:$0xff]
    %v294 = vld [vmem:[#allocation4 + $0x98] sm:$0xff]
    %v295 = vld [vmem:[#allocation4 + $0xa0] sm:$0xff]
    %v296 = vld [vmem:[#allocation4 + $0xa8] sm:$0xff]
    %v297 = vld [vmem:[#allocation4 + $0xb0] sm:$0xff]
    %v298 = vld [vmem:[#allocation4 + $0xb8] sm:$0xff]
    %v299 = vld [vmem:[#allocation4 + $0xc0] sm:$0xff]
    %v300 = vld [vmem:[#allocation4 + $0xc8] sm:$0xff]
    %v301 = vld [vmem:[#allocation4 + $0xd0] sm:$0xff]
    %v302 = vld [vmem:[#allocation4 + $0xd8] sm:$0xff]
    %v303 = vld [vmem:[#allocation4 + $0xe0] sm:$0xff]
    %v304 = vld [vmem:[#allocation4 + $0xe8] sm:$0xff]
    %v305 = vld [vmem:[#allocation4 + $0xf0] sm:$0xff]
    %v306 = vld [vmem:[#allocation4 + $0xf8] sm:$0xff]
    %v307 = vld [vmem:[#allocation4 + $0x100] sm:$0xff]
    %v308 = vld [vmem:[#allocation4 + $0x108] sm:$0xff]
    %v309 = vld [vmem:[#allocation4 + $0x110] sm:$0xff]
    %v310 = vld [vmem:[#allocation4 + $0x118] sm:$0xff]
    %v311 = vld [vmem:[#allocation4 + $0x120] sm:$0xff]
    %v312 = vld [vmem:[#allocation4 + $0x128] sm:$0xff]
    %v313 = vld [vmem:[#allocation4 + $0x130] sm:$0xff]
    %v314 = vld [vmem:[#allocation4 + $0x138] sm:$0xff]
    %v315 = vld [vmem:[#allocation4 + $0x140] sm:$0xff]
    %v316 = vld [vmem:[#allocation4 + $0x148] sm:$0xff]
    %v317 = vld [vmem:[#allocation4 + $0x150] sm:$0xff]
    %v318 = vld [vmem:[#allocation4 + $0x158] sm:$0xff]
    %v319 = vld [vmem:[#allocation4 + $0x160] sm:$0xff]
    %v320 = vld [vmem:[#allocation4 + $0x168] sm:$0xff]
    %v321 = vld [vmem:[#allocation4 + $0x170] sm:$0xff]
    %v322 = vld [vmem:[#allocation4 + $0x178] sm:$0xff]
    %v323 = vld [vmem:[#allocation4 + $0x180] sm:$0xff]
    %v324 = vld [vmem:[#allocation4 + $0x188] sm:$0xff]
    %v325 = vld [vmem:[#allocation4 + $0x190] sm:$0xff]
    %v326 = vld [vmem:[#allocation4 + $0x198] sm:$0xff]
    %v327 = vld [vmem:[#allocation4 + $0x1a0] sm:$0xff]
    %v328 = vld [vmem:[#allocation4 + $0x1a8] sm:$0xff]
    %v329 = vld [vmem:[#allocation4 + $0x1b0] sm:$0xff]
    %v330 = vld [vmem:[#allocation4 + $0x1b8] sm:$0xff]
    %v331 = vld [vmem:[#allocation4 + $0x1c0] sm:$0xff]
    %v332 = vld [vmem:[#allocation4 + $0x1c8] sm:$0xff]
    %v333 = vld [vmem:[#allocation4 + $0x1d0] sm:$0xff]
    %v334 = vld [vmem:[#allocation4 + $0x1d8] sm:$0xff]
    %v335 = vld [vmem:[#allocation4 + $0x1e0] sm:$0xff]
    %v336 = vld [vmem:[#allocation4 + $0x1e8] sm:$0xff]
    %v337 = vld [vmem:[#allocation4 + $0x1f0] sm:$0xff]
    %v338 = vld [vmem:[#allocation4 + $0x1f8] sm:$0xff]
    %v339 = vld [vmem:[%s3] sm:$0x3]
    %v341 = vlaneseq
    %v342 = vshrl.u32 %v341, 7
    %v343 = vsub.s32 0, %v342
    %v344 = vrot.slane %v339, %v343
    %v345 = vlaneseq
    %v346 = vshrl.u32 %v345, 7
    %v347 = vsub.s32 1, %v346
    %v348 = vrot.slane %v339, %v347
    %351 = vmatprep.subr.mxu0 %v276
    %352 = vmatpush1.msra.mxu0 %v275
    %353 = vmatprep.subr.mxu0 %v278
    %354 = vmatpush1.msra.mxu0 %v277
    %355 = vmatprep.subr.mxu0 %v280
    %356 = vmatpush1.msra.mxu0 %v279
    %357 = vmatprep.subr.mxu0 %v282
    %358 = vmatpush1.msra.mxu0 %v281
    %359 = vmatprep.subr.mxu0 %v284
    %360 = vmatpush1.msra.mxu0 %v283
    %361 = vmatprep.subr.mxu0 %v286
    %362 = vmatpush1.msra.mxu0 %v285
    %363 = vmatprep.subr.mxu0 %v288
    %364 = vmatpush1.msra.mxu0 %v287
    %365 = vmatprep.subr.mxu0 %v290
    %366 = vmatpush1.msra.mxu0 %v289
    %367 = vmatprep.subr.mxu0 %v292
    %368 = vmatpush1.msra.mxu0 %v291
    %369 = vmatprep.subr.mxu0 %v294
    %370 = vmatpush1.msra.mxu0 %v293
    %371 = vmatprep.subr.mxu0 %v296
    %372 = vmatpush1.msra.mxu0 %v295
    %373 = vmatprep.subr.mxu0 %v298
    %374 = vmatpush1.msra.mxu0 %v297
    %375 = vmatprep.subr.mxu0 %v300
    %376 = vmatpush1.msra.mxu0 %v299
    %377 = vmatprep.subr.mxu0 %v302
    %378 = vmatpush1.msra.mxu0 %v301
    %379 = vmatprep.subr.mxu0 %v304
    %380 = vmatpush1.msra.mxu0 %v303
    %381 = vmatprep.subr.mxu0 %v306
    %382 = vmatpush1.msra.mxu0 %v305
    %383 = vmatprep.subr.mxu0 %v308
    %384 = vmatpush1.msra.mxu0 %v307
    %385 = vmatprep.subr.mxu0 %v310
    %386 = vmatpush1.msra.mxu0 %v309
    %387 = vmatprep.subr.mxu0 %v312
    %388 = vmatpush1.msra.mxu0 %v311
    %389 = vmatprep.subr.mxu0 %v314
    %390 = vmatpush1.msra.mxu0 %v313
    %391 = vmatprep.subr.mxu0 %v316
    %392 = vmatpush1.msra.mxu0 %v315
    %393 = vmatprep.subr.mxu0 %v318
    %394 = vmatpush1.msra.mxu0 %v317
    %395 = vmatprep.subr.mxu0 %v320
    %396 = vmatpush1.msra.mxu0 %v319
    %397 = vmatprep.subr.mxu0 %v322
    %398 = vmatpush1.msra.mxu0 %v321
    %399 = vmatprep.subr.mxu0 %v324
    %400 = vmatpush1.msra.mxu0 %v323
    %401 = vmatprep.subr.mxu0 %v326
    %402 = vmatpush1.msra.mxu0 %v325
    %403 = vmatprep.subr.mxu0 %v328
    %404 = vmatpush1.msra.mxu0 %v327
    %405 = vmatprep.subr.mxu0 %v330
    %406 = vmatpush1.msra.mxu0 %v329
    %407 = vmatprep.subr.mxu0 %v332
    %408 = vmatpush1.msra.mxu0 %v331
    %409 = vmatprep.subr.mxu0 %v334
    %410 = vmatpush1.msra.mxu0 %v333
    %411 = vmatprep.subr.mxu0 %v336
    %412 = vmatpush1.msra.mxu0 %v335
    %413 = vmatprep.subr.mxu0 %v338
    %414 = vmatpush1.msra.mxu0 %v337
    %415 = vmatprep.mubr.f32.mxu0 %v272
    %416 = vmatmul.mubr.f32.gmra.mrb[0].mxu0 %v271
    %v417 = vpop.f32.mrb[0].mxu0
    %v418 = vadd.f32 %v344, %v417
    %v419 = vpop.f32.mrb[0].mxu0
    %v420 = vadd.f32 %v348, %v419
    %421 = vdwg.mxu0
    %v422 = vmax.f32 %v418, 0.0
    %v423 = vmax.f32 %v420, 0.0
    %v424 = vld [vmem:[#allocation4 + $0x200] sm:$0xff]
    %v425 = vld [vmem:[#allocation4 + $0x208] sm:$0xff]
    %v426 = vld [vmem:[#allocation4 + $0x210] sm:$0xff]
    %v427 = vld [vmem:[#allocation4 + $0x218] sm:$0xff]
    %v428 = vld [vmem:[#allocation4 + $0x220] sm:$0xff]
    %v429 = vld [vmem:[#allocation4 + $0x228] sm:$0xff]
    %v430 = vld [vmem:[#allocation4 + $0x230] sm:$0xff]
    %v431 = vld [vmem:[#allocation4 + $0x238] sm:$0xff]
    %v432 = vld [vmem:[#allocation4 + $0x240] sm:$0xff]
    %v433 = vld [vmem:[#allocation4 + $0x248] sm:$0xff]
    %v434 = vld [vmem:[#allocation4 + $0x250] sm:$0xff]
    %v435 = vld [vmem:[#allocation4 + $0x258] sm:$0xff]
    %v436 = vld [vmem:[#allocation4 + $0x260] sm:$0xff]
    %v437 = vld [vmem:[#allocation4 + $0x268] sm:$0xff]
    %v438 = vld [vmem:[#allocation4 + $0x270] sm:$0xff]
    %v439 = vld [vmem:[#allocation4 + $0x278] sm:$0xff]
    %v440 = vld [vmem:[#allocation4 + $0x280] sm:$0xff]
    %v441 = vld [vmem:[#allocation4 + $0x288] sm:$0xff]
    %v442 = vld [vmem:[#allocation4 + $0x290] sm:$0xff]
    %v443 = vld [vmem:[#allocation4 + $0x298] sm:$0xff]
    %v444 = vld [vmem:[#allocation4 + $0x2a0] sm:$0xff]
    %v445 = vld [vmem:[#allocation4 + $0x2a8] sm:$0xff]
    %v446 = vld [vmem:[#allocation4 + $0x2b0] sm:$0xff]
    %v447 = vld [vmem:[#allocation4 + $0x2b8] sm:$0xff]
    %v448 = vld [vmem:[#allocation4 + $0x2c0] sm:$0xff]
    %v449 = vld [vmem:[#allocation4 + $0x2c8] sm:$0xff]
    %v450 = vld [vmem:[#allocation4 + $0x2d0] sm:$0xff]
    %v451 = vld [vmem:[#allocation4 + $0x2d8] sm:$0xff]
    %v452 = vld [vmem:[#allocation4 + $0x2e0] sm:$0xff]
    %v453 = vld [vmem:[#allocation4 + $0x2e8] sm:$0xff]
    %v454 = vld [vmem:[#allocation4 + $0x2f0] sm:$0xff]
    %v455 = vld [vmem:[#allocation4 + $0x2f8] sm:$0xff]
    %v456 = vld [vmem:[#allocation4 + $0x300] sm:$0xff]
    %v457 = vld [vmem:[#allocation4 + $0x308] sm:$0xff]
    %v458 = vld [vmem:[#allocation4 + $0x310] sm:$0xff]
    %v459 = vld [vmem:[#allocation4 + $0x318] sm:$0xff]
    %v460 = vld [vmem:[#allocation4 + $0x320] sm:$0xff]
    %v461 = vld [vmem:[#allocation4 + $0x328] sm:$0xff]
    %v462 = vld [vmem:[#allocation4 + $0x330] sm:$0xff]
    %v463 = vld [vmem:[#allocation4 + $0x338] sm:$0xff]
    %v464 = vld [vmem:[#allocation4 + $0x340] sm:$0xff]
    %v465 = vld [vmem:[#allocation4 + $0x348] sm:$0xff]
    %v466 = vld [vmem:[#allocation4 + $0x350] sm:$0xff]
    %v467 = vld [vmem:[#allocation4 + $0x358] sm:$0xff]
    %v468 = vld [vmem:[#allocation4 + $0x360] sm:$0xff]
    %v469 = vld [vmem:[#allocation4 + $0x368] sm:$0xff]
    %v470 = vld [vmem:[#allocation4 + $0x370] sm:$0xff]
    %v471 = vld [vmem:[#allocation4 + $0x378] sm:$0xff]
    %v472 = vld [vmem:[#allocation4 + $0x380] sm:$0xff]
    %v473 = vld [vmem:[#allocation4 + $0x388] sm:$0xff]
    %v474 = vld [vmem:[#allocation4 + $0x390] sm:$0xff]
    %v475 = vld [vmem:[#allocation4 + $0x398] sm:$0xff]
    %v476 = vld [vmem:[#allocation4 + $0x3a0] sm:$0xff]
    %v477 = vld [vmem:[#allocation4 + $0x3a8] sm:$0xff]
    %v478 = vld [vmem:[#allocation4 + $0x3b0] sm:$0xff]
    %v479 = vld [vmem:[#allocation4 + $0x3b8] sm:$0xff]
    %v480 = vld [vmem:[#allocation4 + $0x3c0] sm:$0xff]
    %v481 = vld [vmem:[#allocation4 + $0x3c8] sm:$0xff]
    %v482 = vld [vmem:[#allocation4 + $0x3d0] sm:$0xff]
    %v483 = vld [vmem:[#allocation4 + $0x3d8] sm:$0xff]
    %v484 = vld [vmem:[#allocation4 + $0x3e0] sm:$0xff]
    %v485 = vld [vmem:[#allocation4 + $0x3e8] sm:$0xff]
    %v486 = vld [vmem:[#allocation4 + $0x3f0] sm:$0xff]
    %v487 = vld [vmem:[#allocation4 + $0x3f8] sm:$0xff]
    %v488 = vld [vmem:[%s3 + $0x2] sm:$0x3]
    %v490 = vlaneseq
    %v491 = vshrl.u32 %v490, 7
    %v492 = vsub.s32 0, %v491
    %v493 = vrot.slane %v488, %v492
    %v494 = vlaneseq
    %v495 = vshrl.u32 %v494, 7
    %v496 = vsub.s32 1, %v495
    %v497 = vrot.slane %v488, %v496
    %500 = vmatprep.subr.mxu0 %v425
    %501 = vmatpush1.msra.mxu0 %v424
    %502 = vmatprep.subr.mxu0 %v427
    %503 = vmatpush1.msra.mxu0 %v426
    %504 = vmatprep.subr.mxu0 %v429
    %505 = vmatpush1.msra.mxu0 %v428
    %506 = vmatprep.subr.mxu0 %v431
    %507 = vmatpush1.msra.mxu0 %v430
    %508 = vmatprep.subr.mxu0 %v433
    %509 = vmatpush1.msra.mxu0 %v432
    %510 = vmatprep.subr.mxu0 %v435
    %511 = vmatpush1.msra.mxu0 %v434
    %512 = vmatprep.subr.mxu0 %v437
    %513 = vmatpush1.msra.mxu0 %v436
    %514 = vmatprep.subr.mxu0 %v439
    %515 = vmatpush1.msra.mxu0 %v438
    %516 = vmatprep.subr.mxu0 %v441
    %517 = vmatpush1.msra.mxu0 %v440
    %518 = vmatprep.subr.mxu0 %v443
    %519 = vmatpush1.msra.mxu0 %v442
    %520 = vmatprep.subr.mxu0 %v445
    %521 = vmatpush1.msra.mxu0 %v444
    %522 = vmatprep.subr.mxu0 %v447
    %523 = vmatpush1.msra.mxu0 %v446
    %524 = vmatprep.subr.mxu0 %v449
    %525 = vmatpush1.msra.mxu0 %v448
    %526 = vmatprep.subr.mxu0 %v451
    %527 = vmatpush1.msra.mxu0 %v450
    %528 = vmatprep.subr.mxu0 %v453
    %529 = vmatpush1.msra.mxu0 %v452
    %530 = vmatprep.subr.mxu0 %v455
    %531 = vmatpush1.msra.mxu0 %v454
    %532 = vmatprep.subr.mxu0 %v457
    %533 = vmatpush1.msra.mxu0 %v456
    %534 = vmatprep.subr.mxu0 %v459
    %535 = vmatpush1.msra.mxu0 %v458
    %536 = vmatprep.subr.mxu0 %v461
    %537 = vmatpush1.msra.mxu0 %v460
    %538 = vmatprep.subr.mxu0 %v463
    %539 = vmatpush1.msra.mxu0 %v462
    %540 = vmatprep.subr.mxu0 %v465
    %541 = vmatpush1.msra.mxu0 %v464
    %542 = vmatprep.subr.mxu0 %v467
    %543 = vmatpush1.msra.mxu0 %v466
    %544 = vmatprep.subr.mxu0 %v469
    %545 = vmatpush1.msra.mxu0 %v468
    %546 = vmatprep.subr.mxu0 %v471
    %547 = vmatpush1.msra.mxu0 %v470
    %548 = vmatprep.subr.mxu0 %v473
    %549 = vmatpush1.msra.mxu0 %v472
    %550 = vmatprep.subr.mxu0 %v475
    %551 = vmatpush1.msra.mxu0 %v474
    %552 = vmatprep.subr.mxu0 %v477
    %553 = vmatpush1.msra.mxu0 %v476
    %554 = vmatprep.subr.mxu0 %v479
    %555 = vmatpush1.msra.mxu0 %v478
    %556 = vmatprep.subr.mxu0 %v481
    %557 = vmatpush1.msra.mxu0 %v480
    %558 = vmatprep.subr.mxu0 %v483
    %559 = vmatpush1.msra.mxu0 %v482
    %560 = vmatprep.subr.mxu0 %v485
    %561 = vmatpush1.msra.mxu0 %v484
    %562 = vmatprep.subr.mxu0 %v487
    %563 = vmatpush1.msra.mxu0 %v486
    %564 = vmatprep.mubr.f32.mxu0 %v274
    %565 = vmatmul.mubr.f32.gmra.mrb[0].mxu0 %v273
    %v566 = vpop.f32.mrb[0].mxu0
    %v567 = vadd.f32 %v493, %v566
    %v568 = vpop.f32.mrb[0].mxu0
    %v569 = vadd.f32 %v497, %v568
    %570 = vdwg.mxu0
    %v571 = vmax.f32 %v567, 0.0
    %v572 = vmax.f32 %v569, 0.0
    %v573 = vld [vmem:[#allocation6] sm:$0xff]
    %v574 = vld [vmem:[#allocation6 + $0x8] sm:$0xff]
    %v575 = vld [vmem:[#allocation6 + $0x10] sm:$0xff]
    %v576 = vld [vmem:[#allocation6 + $0x18] sm:$0xff]
    %v577 = vld [vmem:[#allocation6 + $0x20] sm:$0xff]
    %v578 = vld [vmem:[#allocation6 + $0x28] sm:$0xff]
    %v579 = vld [vmem:[#allocation6 + $0x30] sm:$0xff]
    %v580 = vld [vmem:[#allocation6 + $0x38] sm:$0xff]
    %v581 = vld [vmem:[#allocation6 + $0x40] sm:$0xff]
    %v582 = vld [vmem:[#allocation6 + $0x48] sm:$0xff]
    %v583 = vld [vmem:[#allocation6 + $0x50] sm:$0xff]
    %v584 = vld [vmem:[#allocation6 + $0x58] sm:$0xff]
    %v585 = vld [vmem:[#allocation6 + $0x60] sm:$0xff]
    %v586 = vld [vmem:[#allocation6 + $0x68] sm:$0xff]
    %v587 = vld [vmem:[#allocation6 + $0x70] sm:$0xff]
    %v588 = vld [vmem:[#allocation6 + $0x78] sm:$0xff]
    %v589 = vld [vmem:[#allocation6 + $0x80] sm:$0xff]
    %v590 = vld [vmem:[#allocation6 + $0x88] sm:$0xff]
    %v591 = vld [vmem:[#allocation6 + $0x90] sm:$0xff]
    %v592 = vld [vmem:[#allocation6 + $0x98] sm:$0xff]
    %v593 = vld [vmem:[#allocation6 + $0xa0] sm:$0xff]
    %v594 = vld [vmem:[#allocation6 + $0xa8] sm:$0xff]
    %v595 = vld [vmem:[#allocation6 + $0xb0] sm:$0xff]
    %v596 = vld [vmem:[#allocation6 + $0xb8] sm:$0xff]
    %v597 = vld [vmem:[#allocation6 + $0xc0] sm:$0xff]
    %v598 = vld [vmem:[#allocation6 + $0xc8] sm:$0xff]
    %v599 = vld [vmem:[#allocation6 + $0xd0] sm:$0xff]
    %v600 = vld [vmem:[#allocation6 + $0xd8] sm:$0xff]
    %v601 = vld [vmem:[#allocation6 + $0xe0] sm:$0xff]
    %v602 = vld [vmem:[#allocation6 + $0xe8] sm:$0xff]
    %v603 = vld [vmem:[#allocation6 + $0xf0] sm:$0xff]
    %v604 = vld [vmem:[#allocation6 + $0xf8] sm:$0xff]
    %v605 = vld [vmem:[#allocation6 + $0x100] sm:$0xff]
    %v606 = vld [vmem:[#allocation6 + $0x108] sm:$0xff]
    %v607 = vld [vmem:[#allocation6 + $0x110] sm:$0xff]
    %v608 = vld [vmem:[#allocation6 + $0x118] sm:$0xff]
    %v609 = vld [vmem:[#allocation6 + $0x120] sm:$0xff]
    %v610 = vld [vmem:[#allocation6 + $0x128] sm:$0xff]
    %v611 = vld [vmem:[#allocation6 + $0x130] sm:$0xff]
    %v612 = vld [vmem:[#allocation6 + $0x138] sm:$0xff]
    %v613 = vld [vmem:[#allocation6 + $0x140] sm:$0xff]
    %v614 = vld [vmem:[#allocation6 + $0x148] sm:$0xff]
    %v615 = vld [vmem:[#allocation6 + $0x150] sm:$0xff]
    %v616 = vld [vmem:[#allocation6 + $0x158] sm:$0xff]
    %v617 = vld [vmem:[#allocation6 + $0x160] sm:$0xff]
    %v618 = vld [vmem:[#allocation6 + $0x168] sm:$0xff]
    %v619 = vld [vmem:[#allocation6 + $0x170] sm:$0xff]
    %v620 = vld [vmem:[#allocation6 + $0x178] sm:$0xff]
    %v621 = vld [vmem:[#allocation6 + $0x180] sm:$0xff]
    %v622 = vld [vmem:[#allocation6 + $0x188] sm:$0xff]
    %v623 = vld [vmem:[#allocation6 + $0x190] sm:$0xff]
    %v624 = vld [vmem:[#allocation6 + $0x198] sm:$0xff]
    %v625 = vld [vmem:[#allocation6 + $0x1a0] sm:$0xff]
    %v626 = vld [vmem:[#allocation6 + $0x1a8] sm:$0xff]
    %v627 = vld [vmem:[#allocation6 + $0x1b0] sm:$0xff]
    %v628 = vld [vmem:[#allocation6 + $0x1b8] sm:$0xff]
    %v629 = vld [vmem:[#allocation6 + $0x1c0] sm:$0xff]
    %v630 = vld [vmem:[#allocation6 + $0x1c8] sm:$0xff]
    %v631 = vld [vmem:[#allocation6 + $0x1d0] sm:$0xff]
    %v632 = vld [vmem:[#allocation6 + $0x1d8] sm:$0xff]
    %v633 = vld [vmem:[#allocation6 + $0x1e0] sm:$0xff]
    %v634 = vld [vmem:[#allocation6 + $0x1e8] sm:$0xff]
    %v635 = vld [vmem:[#allocation6 + $0x1f0] sm:$0xff]
    %v636 = vld [vmem:[#allocation6 + $0x1f8] sm:$0xff]
    %637 = vmatprep.subr.mxu0 0.0
    %638 = vmatpush1.msra.mxu0 %v605
    %639 = vmatprep.subr.mxu0 0.0
    %640 = vmatpush1.msra.mxu0 %v606
    %641 = vmatprep.subr.mxu0 0.0
    %642 = vmatpush1.msra.mxu0 %v607
    %643 = vmatprep.subr.mxu0 0.0
    %644 = vmatpush1.msra.mxu0 %v608
    %645 = vmatprep.subr.mxu0 0.0
    %646 = vmatpush1.msra.mxu0 %v609
    %647 = vmatprep.subr.mxu0 0.0
    %648 = vmatpush1.msra.mxu0 %v610
    %649 = vmatprep.subr.mxu0 0.0
    %650 = vmatpush1.msra.mxu0 %v611
    %651 = vmatprep.subr.mxu0 0.0
    %652 = vmatpush1.msra.mxu0 %v612
    %653 = vmatprep.subr.mxu0 0.0
    %654 = vmatpush1.msra.mxu0 %v613
    %655 = vmatprep.subr.mxu0 0.0
    %656 = vmatpush1.msra.mxu0 %v614
    %657 = vmatprep.subr.mxu0 0.0
    %658 = vmatpush1.msra.mxu0 %v615
    %659 = vmatprep.subr.mxu0 0.0
    %660 = vmatpush1.msra.mxu0 %v616
    %661 = vmatprep.subr.mxu0 0.0
    %662 = vmatpush1.msra.mxu0 %v617
    %663 = vmatprep.subr.mxu0 0.0
    %664 = vmatpush1.msra.mxu0 %v618
    %665 = vmatprep.subr.mxu0 0.0
    %666 = vmatpush1.msra.mxu0 %v619
    %667 = vmatprep.subr.mxu0 0.0
    %668 = vmatpush1.msra.mxu0 %v620
    %669 = vmatprep.subr.mxu0 0.0
    %670 = vmatpush1.msra.mxu0 %v621
    %671 = vmatprep.subr.mxu0 0.0
    %672 = vmatpush1.msra.mxu0 %v622
    %673 = vmatprep.subr.mxu0 0.0
    %674 = vmatpush1.msra.mxu0 %v623
    %675 = vmatprep.subr.mxu0 0.0
    %676 = vmatpush1.msra.mxu0 %v624
    %677 = vmatprep.subr.mxu0 0.0
    %678 = vmatpush1.msra.mxu0 %v625
    %679 = vmatprep.subr.mxu0 0.0
    %680 = vmatpush1.msra.mxu0 %v626
    %681 = vmatprep.subr.mxu0 0.0
    %682 = vmatpush1.msra.mxu0 %v627
    %683 = vmatprep.subr.mxu0 0.0
    %684 = vmatpush1.msra.mxu0 %v628
    %685 = vmatprep.subr.mxu0 0.0
    %686 = vmatpush1.msra.mxu0 %v629
    %687 = vmatprep.subr.mxu0 0.0
    %688 = vmatpush1.msra.mxu0 %v630
    %689 = vmatprep.subr.mxu0 0.0
    %690 = vmatpush1.msra.mxu0 %v631
    %691 = vmatprep.subr.mxu0 0.0
    %692 = vmatpush1.msra.mxu0 %v632
    %693 = vmatprep.subr.mxu0 0.0
    %694 = vmatpush1.msra.mxu0 %v633
    %695 = vmatprep.subr.mxu0 0.0
    %696 = vmatpush1.msra.mxu0 %v634
    %697 = vmatprep.subr.mxu0 0.0
    %698 = vmatpush1.msra.mxu0 %v635
    %699 = vmatprep.subr.mxu0 0.0
    %700 = vmatpush1.msra.mxu0 %v636
    %701 = vmatprep.mubr.f32.mxu0 %v572
    %702 = vmatmul.mubr.f32.gmra.mrb[0].mxu0 %v571
    %v703 = vpop.f32.mrb[0].mxu0
    %v704 = vadd.f32 0.0, %v703
    %v705 = vpop.f32.mrb[0].mxu0
    %706 = vdwg.mxu0
    %707 = vmatprep.subr.mxu0 0.0
    %708 = vmatpush1.msra.mxu0 %v573
    %709 = vmatprep.subr.mxu0 0.0
    %710 = vmatpush1.msra.mxu0 %v574
    %711 = vmatprep.subr.mxu0 0.0
    %712 = vmatpush1.msra.mxu0 %v575
    %713 = vmatprep.subr.mxu0 0.0
    %714 = vmatpush1.msra.mxu0 %v576
    %715 = vmatprep.subr.mxu0 0.0
    %716 = vmatpush1.msra.mxu0 %v577
    %717 = vmatprep.subr.mxu0 0.0
    %718 = vmatpush1.msra.mxu0 %v578
    %719 = vmatprep.subr.mxu0 0.0
    %720 = vmatpush1.msra.mxu0 %v579
    %721 = vmatprep.subr.mxu0 0.0
    %722 = vmatpush1.msra.mxu0 %v580
    %723 = vmatprep.subr.mxu0 0.0
    %724 = vmatpush1.msra.mxu0 %v581
    %725 = vmatprep.subr.mxu0 0.0
    %726 = vmatpush1.msra.mxu0 %v582
    %727 = vmatprep.subr.mxu0 0.0
    %728 = vmatpush1.msra.mxu0 %v583
    %729 = vmatprep.subr.mxu0 0.0
    %730 = vmatpush1.msra.mxu0 %v584
    %731 = vmatprep.subr.mxu0 0.0
    %732 = vmatpush1.msra.mxu0 %v585
    %733 = vmatprep.subr.mxu0 0.0
    %734 = vmatpush1.msra.mxu0 %v586
    %735 = vmatprep.subr.mxu0 0.0
    %736 = vmatpush1.msra.mxu0 %v587
    %737 = vmatprep.subr.mxu0 0.0
    %738 = vmatpush1.msra.mxu0 %v588
    %739 = vmatprep.subr.mxu0 0.0
    %740 = vmatpush1.msra.mxu0 %v589
    %741 = vmatprep.subr.mxu0 0.0
    %742 = vmatpush1.msra.mxu0 %v590
    %743 = vmatprep.subr.mxu0 0.0
    %744 = vmatpush1.msra.mxu0 %v591
    %745 = vmatprep.subr.mxu0 0.0
    %746 = vmatpush1.msra.mxu0 %v592
    %747 = vmatprep.subr.mxu0 0.0
    %748 = vmatpush1.msra.mxu0 %v593
    %749 = vmatprep.subr.mxu0 0.0
    %750 = vmatpush1.msra.mxu0 %v594
    %751 = vmatprep.subr.mxu0 0.0
    %752 = vmatpush1.msra.mxu0 %v595
    %753 = vmatprep.subr.mxu0 0.0
    %754 = vmatpush1.msra.mxu0 %v596
    %755 = vmatprep.subr.mxu0 0.0
    %756 = vmatpush1.msra.mxu0 %v597
    %757 = vmatprep.subr.mxu0 0.0
    %758 = vmatpush1.msra.mxu0 %v598
    %759 = vmatprep.subr.mxu0 0.0
    %760 = vmatpush1.msra.mxu0 %v599
    %761 = vmatprep.subr.mxu0 0.0
    %762 = vmatpush1.msra.mxu0 %v600
    %763 = vmatprep.subr.mxu0 0.0
    %764 = vmatpush1.msra.mxu0 %v601
    %765 = vmatprep.subr.mxu0 0.0
    %766 = vmatpush1.msra.mxu0 %v602
    %767 = vmatprep.subr.mxu0 0.0
    %768 = vmatpush1.msra.mxu0 %v603
    %769 = vmatprep.subr.mxu0 0.0
    %770 = vmatpush1.msra.mxu0 %v604
    %771 = vmatprep.mubr.f32.mxu0 %v423
    %772 = vmatmul.mubr.f32.gmra.mrb[0].mxu0 %v422
    %v773 = vpop.f32.mrb[0].mxu0
    %v774 = vadd.f32 %v704, %v773
    %v775 = vpop.f32.mrb[0].mxu0
    %776 = vdwg.mxu0
    %v777 = vld [vmem:[%s5] sm:$0x1]
    %v779 = vlaneseq
    %v780 = vshrl.u32 %v779, 7
    %v781 = vsub.s32 0, %v780
    %v782 = vrot.slane %v777, %v781
    %v784 = vadd.f32 %v774, %v782
    %785 = vst [vmem:[%s6] sm:$0xff] %v784
    // Predicated region
    $region38: #{critic_forward.1} parent=1 // pred_check
      _
    $region39: #{critic_forward.1} parent=1 // pred_check_branch
      %787 = sbr.rel (0) target = $region41
    $region40: #{critic_forward.1} parent=1 // pred_region
      _
    $region41: #{critic_forward.1} parent=1 // pred_fallthru
      _
    // Predicated region
    $region42: #{critic_forward.1} parent=1 // pred_check
      _
    $region43: #{critic_forward.1} parent=1 // pred_check_branch
      %789 = sbr.rel (0) target = $region45
    $region44: #{critic_forward.1} parent=1 // pred_region
      _
    $region45: #{critic_forward.1} parent=1 // pred_fallthru
      _
    %790 = vsyncpa [#allocation3], 1
    %791 = vsyncpa [#allocation5], 1

</llo_original>
